<compile_context>
chip_gen: v6e
topology: v6e:2x2x1
jax: 0.10.0
libtpu: 0.0.40
codegen_flags: <defaults>
</compile_context>

<pallas_src>
import math

import jax
import jax.numpy as jnp
from jax.experimental import pallas as pl
from jax.experimental.pallas import tpu as pltpu


def _round_up(x, m):
    return ((x + m - 1) // m) * m


def mlp_kernel(x_ref, w1_ref, b1_ref, w2_ref, b2_ref, w3_ref, b3_ref, o_ref):
    """Fused Linear->Tanh->Linear->Tanh->Linear on one batch tile.

    Matmuls run on the MXU with bf16 operands and f32 accumulation; bias adds run
    on the VPU and tanh on the EUP, both in f32.
    """
    # Cast x to the matmul dtype in-kernel (VPU slot is free) instead of a separate
    # wrapper-side XLA cast pass over x in HBM.
    x = x_ref[...].astype(w1_ref.dtype)
    h1 = jnp.tanh(
        jnp.dot(x, w1_ref[...], preferred_element_type=jnp.float32) + b1_ref[...]
    )
    h2 = jnp.tanh(
        jnp.dot(h1.astype(w2_ref.dtype), w2_ref[...],
                preferred_element_type=jnp.float32) + b2_ref[...]
    )
    out = jnp.dot(h2.astype(w3_ref.dtype), w3_ref[...],
                  preferred_element_type=jnp.float32) + b3_ref[...]
    o_ref[...] = out.astype(o_ref.dtype)


def prepare_params(params, matmul_dtype=jnp.bfloat16):
    """One-time weight preparation (hoisted out of the per-call path).

    Pads the hidden width up to a multiple of 128 so intermediates and the
    hidden-layer matmul K/N dims are lane-dense. Padding is exact: padded weight
    and bias columns are zero and tanh(0) = 0. Weights are cast to the MXU-native
    matmul dtype; biases stay f32.
    """
    w1, b1, w2, b2, w3, b3 = params
    mid = w1.shape[1]
    mid_pad = _round_up(max(mid, 128), 128)
    dm = mid_pad - mid

    w1p = jnp.pad(w1, ((0, 0), (0, dm))).astype(matmul_dtype)
    b1p = jnp.pad(b1, ((0, 0), (0, dm))).astype(jnp.float32)
    w2p = jnp.pad(w2, ((0, dm), (0, dm))).astype(matmul_dtype)
    b2p = jnp.pad(b2, ((0, 0), (0, dm))).astype(jnp.float32)
    w3p = jnp.pad(w3, ((0, dm), (0, 0))).astype(matmul_dtype)
    b3p = b3.astype(jnp.float32)
    return (w1p, b1p, w2p, b2p, w3p, b3p)


def multilayer_forward(x, prepared, *, block_batch=1024):
    """Full MLP forward in one Pallas kernel, pipelined over batch tiles.

    x: (B, in_dim) float32. `prepared` comes from prepare_params() (weights are
    (in, out), i.e. transposed vs nn.Linear, bf16, hidden width padded to 128k).
    """
    w1, b1, w2, b2, w3, b3 = prepared
    B, in_dim = x.shape
    assert w1.shape[0] == in_dim
    mid_pad = w1.shape[1]
    out_dim = w3.shape[1]

    # Batch tile: multiple of 8 (sublanes), 256-aligned when large (full MXU rows
    # on v6e/v7x, megacore-friendly). No host-side batch padding: the last tile is
    # ragged and Pallas masks its out-of-bounds output rows.
    tb = min(block_batch, _round_up(B, 8))
    if tb >= 512:
        tb = (tb // 256) * 256
    tb = max(8, (tb // 8) * 8)

    grid = (pl.cdiv(B, tb),)

    def resident(arr):
        # Constant index_map: the block index never changes across grid steps, so
        # the buffer is fetched once and stays VMEM-resident (no per-step re-DMA).
        return pl.BlockSpec(arr.shape, lambda i: (0,) * arr.ndim)

    weight_bytes = sum(int(a.size) * a.dtype.itemsize for a in (w1, w2, w3))
    bias_bytes = sum(int(a.size) * a.dtype.itemsize for a in (b1, b2, b3))
    # Resident weights/biases + double-buffered x/out tiles + live f32 intermediates,
    # with 2x headroom; clamped to [32 MiB, 64 MiB] so it is safe on v5e/v6e (128 MiB
    # physical) and on v7x (64 MiB/TC physical).
    budget = (weight_bytes + bias_bytes
              + 2 * tb * in_dim * 4
              + 2 * tb * out_dim * 4
              + 2 * tb * mid_pad * 4)
    vmem_limit = int(min(max(2 * budget, 32 * 1024 * 1024), 64 * 1024 * 1024))

    cost = pl.CostEstimate(
        flops=2 * B * (in_dim * mid_pad + mid_pad * mid_pad + mid_pad * out_dim),
        transcendentals=2 * B * mid_pad,
        bytes_accessed=B * in_dim * 4 + B * out_dim * 4 + weight_bytes + bias_bytes,
    )

    return pl.pallas_call(
        mlp_kernel,
        out_shape=jax.ShapeDtypeStruct((B, out_dim), x.dtype),
        grid=grid,
        in_specs=[
            pl.BlockSpec((tb, in_dim), lambda i: (i, 0)),   # pipelined per batch tile
            resident(w1), resident(b1),
            resident(w2), resident(b2),
            resident(w3), resident(b3),
        ],
        out_specs=pl.BlockSpec((tb, out_dim), lambda i: (i, 0)),
        compiler_params=pltpu.CompilerParams(
            dimension_semantics=("parallel",),   # megacore sharding on v7x
            vmem_limit_bytes=vmem_limit,
        ),
        cost_estimate=cost,
    )(x, w1, b1, w2, b2, w3, b3)


def init_params(key, input_layer, middle_layer, output_layer):
    """Deterministic init mimicking nn.Linear default U[-1/sqrt(fan_in), 1/sqrt(fan_in)]."""
    keys = jax.random.split(key, 6)

    def linear(kw, kb, fan_in, fan_out):
        bound = 1.0 / math.sqrt(fan_in)
        w = jax.random.uniform(kw, (fan_in, fan_out), jnp.float32, -bound, bound)
        b = jax.random.uniform(kb, (1, fan_out), jnp.float32, -bound, bound)
        return w, b

    w1, b1 = linear(keys[0], keys[1], input_layer, middle_layer)
    w2, b2 = linear(keys[2], keys[3], middle_layer, middle_layer)
    w3, b3 = linear(keys[4], keys[5], middle_layer, output_layer)
    return (w1, b1, w2, b2, w3, b3)


def reference_forward(x, params):
    w1, b1, w2, b2, w3, b3 = params
    h1 = jnp.tanh(x @ w1 + b1)
    h2 = jnp.tanh(h1 @ w2 + b2)
    return h2 @ w3 + b3


if __name__ == "__main__":
    input_layer, middle_layer, output_layer = 32, 64, 16
    batch = 50  # deliberately not a multiple of the tile -> exercises the ragged last tile

    key = jax.random.PRNGKey(0)
    k_params, k_x = jax.random.split(key)
    params = init_params(k_params, input_layer, middle_layer, output_layer)
    x = jax.random.normal(k_x, (batch, input_layer), jnp.float32)

    prepared = prepare_params(params)  # one-time: bf16 cast + lane-dense hidden padding

    # Small block_batch so the grid has several steps plus a ragged last tile
    # (tests the pipelined path, masking, and VMEM-resident weights); production
    # callers use the default 1024.
    out = multilayer_forward(x, prepared, block_batch=16)
    out = jax.block_until_ready(out)

    ref = reference_forward(x, params)
    assert out.shape == (batch, output_layer)
    assert bool(jnp.all(jnp.isfinite(out)))
    # bf16 matmul operands (f32 accumulation, 3 layers) -> small deviation vs pure-f32 ref.
    assert jnp.allclose(out, ref, atol=5e-2, rtol=5e-2), "mismatch vs reference"

    print("KERNEL_OK")
</pallas_src>

<mosaic_0001>
module attributes {stable_mosaic.version = 11 : i64} {
  func.func @mlp_kernel(%arg0: i32, %arg1: memref<16x32xf32, #tpu.memory_space<vmem>>, %arg2: memref<32x128xbf16, #tpu.memory_space<vmem>>, %arg3: memref<1x128xf32, #tpu.memory_space<vmem>>, %arg4: memref<128x128xbf16, #tpu.memory_space<vmem>>, %arg5: memref<1x128xf32, #tpu.memory_space<vmem>>, %arg6: memref<128x16xbf16, #tpu.memory_space<vmem>>, %arg7: memref<1x16xf32, #tpu.memory_space<vmem>>, %arg8: memref<16x16xf32, #tpu.memory_space<vmem>>) attributes {dimension_semantics = [#tpu.dimension_semantics<parallel>], iteration_bounds = array<i64: 4>, scalar_prefetch = 0 : i64, scratch_operands = 0 : i64, tpu.core_type = #tpu.core_type<tc>, window_params = [{transform_indices = @transform_0, window_bounds = array<i64: 16, 32>}, {pipeline_mode = #tpu.pipeline_mode<synchronous>, transform_indices = @transform_1, window_bounds = array<i64: 32, 128>}, {pipeline_mode = #tpu.pipeline_mode<synchronous>, transform_indices = @transform_2, window_bounds = array<i64: 1, 128>}, {pipeline_mode = #tpu.pipeline_mode<synchronous>, transform_indices = @transform_3, window_bounds = array<i64: 128, 128>}, {pipeline_mode = #tpu.pipeline_mode<synchronous>, transform_indices = @transform_4, window_bounds = array<i64: 1, 128>}, {pipeline_mode = #tpu.pipeline_mode<synchronous>, transform_indices = @transform_5, window_bounds = array<i64: 128, 16>}, {pipeline_mode = #tpu.pipeline_mode<synchronous>, transform_indices = @transform_6, window_bounds = array<i64: 1, 16>}, {transform_indices = @transform_7, window_bounds = array<i64: 16, 16>}]} {
    %c0 = arith.constant 0 : index
    %c0_0 = arith.constant 0 : index
    %0 = vector.load %arg1[%c0, %c0_0] : memref<16x32xf32, #tpu.memory_space<vmem>>, vector<16x32xf32>
    %1 = arith.truncf %0 : vector<16x32xf32> to vector<16x32xbf16>
    %c0_1 = arith.constant 0 : index
    %c0_2 = arith.constant 0 : index
    %2 = vector.load %arg2[%c0_1, %c0_2] : memref<32x128xbf16, #tpu.memory_space<vmem>>, vector<32x128xbf16>
    %cst = arith.constant dense<0.000000e+00> : vector<16x128xf32>
    %3 = tpu.matmul %1, %2, %cst {dimension_numbers = #tpu.dot_dimension_numbers<[1], [0], [0], [1], [0, 0, 1, 1], [], []>} : vector<16x32xbf16>, vector<32x128xbf16>, vector<16x128xf32> -> vector<16x128xf32>
    %c0_3 = arith.constant 0 : index
    %c0_4 = arith.constant 0 : index
    %4 = vector.load %arg3[%c0_3, %c0_4] : memref<1x128xf32, #tpu.memory_space<vmem>>, vector<1x128xf32>
    %5 = vector.broadcast %4 : vector<1x128xf32> to vector<16x128xf32>
    %6 = arith.addf %3, %5 : vector<16x128xf32>
    %7 = math.tanh %6 : vector<16x128xf32>
    %8 = arith.truncf %7 : vector<16x128xf32> to vector<16x128xbf16>
    %c0_5 = arith.constant 0 : index
    %c0_6 = arith.constant 0 : index
    %9 = vector.load %arg4[%c0_5, %c0_6] : memref<128x128xbf16, #tpu.memory_space<vmem>>, vector<128x128xbf16>
    %cst_7 = arith.constant dense<0.000000e+00> : vector<16x128xf32>
    %10 = tpu.matmul %8, %9, %cst_7 {dimension_numbers = #tpu.dot_dimension_numbers<[1], [0], [0], [1], [0, 0, 1, 1], [], []>} : vector<16x128xbf16>, vector<128x128xbf16>, vector<16x128xf32> -> vector<16x128xf32>
    %c0_8 = arith.constant 0 : index
    %c0_9 = arith.constant 0 : index
    %11 = vector.load %arg5[%c0_8, %c0_9] : memref<1x128xf32, #tpu.memory_space<vmem>>, vector<1x128xf32>
    %12 = vector.broadcast %11 : vector<1x128xf32> to vector<16x128xf32>
    %13 = arith.addf %10, %12 : vector<16x128xf32>
    %14 = math.tanh %13 : vector<16x128xf32>
    %15 = arith.truncf %14 : vector<16x128xf32> to vector<16x128xbf16>
    %c0_10 = arith.constant 0 : index
    %c0_11 = arith.constant 0 : index
    %16 = vector.load %arg6[%c0_10, %c0_11] : memref<128x16xbf16, #tpu.memory_space<vmem>>, vector<128x16xbf16>
    %cst_12 = arith.constant dense<0.000000e+00> : vector<16x16xf32>
    %17 = tpu.matmul %15, %16, %cst_12 {dimension_numbers = #tpu.dot_dimension_numbers<[1], [0], [0], [1], [0, 0, 1, 1], [], []>} : vector<16x128xbf16>, vector<128x16xbf16>, vector<16x16xf32> -> vector<16x16xf32>
    %c0_13 = arith.constant 0 : index
    %c0_14 = arith.constant 0 : index
    %18 = vector.load %arg7[%c0_13, %c0_14] : memref<1x16xf32, #tpu.memory_space<vmem>>, vector<1x16xf32>
    %19 = vector.broadcast %18 : vector<1x16xf32> to vector<16x16xf32>
    %20 = arith.addf %17, %19 : vector<16x16xf32>
    %c0_15 = arith.constant 0 : index
    %c0_16 = arith.constant 0 : index
    %21 = vector.load %arg8[%c0_15, %c0_16] : memref<16x16xf32, #tpu.memory_space<vmem>>, vector<16x16xf32>
    tpu.vector_store %arg8[%c0_15, %c0_16], %20 {strides = array<i32>} : memref<16x16xf32, #tpu.memory_space<vmem>>, vector<16x16xf32>,
    return
  }
  func.func @transform_0(%arg0: i32) -> (i32, i32) {
    %c0_i32 = arith.constant 0 : i32
    %c0_i32_0 = arith.constant 0 : i32
    return %arg0, %c0_i32 : i32, i32
  }
  func.func @transform_1(%arg0: i32) -> (i32, i32) {
    %c0_i32 = arith.constant 0 : i32
    %c0_i32_0 = arith.constant 0 : i32
    %c0_i32_1 = arith.constant 0 : i32
    return %c0_i32, %c0_i32_0 : i32, i32
  }
  func.func @transform_2(%arg0: i32) -> (i32, i32) {
    %c0_i32 = arith.constant 0 : i32
    %c0_i32_0 = arith.constant 0 : i32
    %c0_i32_1 = arith.constant 0 : i32
    return %c0_i32, %c0_i32_0 : i32, i32
  }
  func.func @transform_3(%arg0: i32) -> (i32, i32) {
    %c0_i32 = arith.constant 0 : i32
    %c0_i32_0 = arith.constant 0 : i32
    %c0_i32_1 = arith.constant 0 : i32
    return %c0_i32, %c0_i32_0 : i32, i32
  }
  func.func @transform_4(%arg0: i32) -> (i32, i32) {
    %c0_i32 = arith.constant 0 : i32
    %c0_i32_0 = arith.constant 0 : i32
    %c0_i32_1 = arith.constant 0 : i32
    return %c0_i32, %c0_i32_0 : i32, i32
  }
  func.func @transform_5(%arg0: i32) -> (i32, i32) {
    %c0_i32 = arith.constant 0 : i32
    %c0_i32_0 = arith.constant 0 : i32
    %c0_i32_1 = arith.constant 0 : i32
    return %c0_i32, %c0_i32_0 : i32, i32
  }
  func.func @transform_6(%arg0: i32) -> (i32, i32) {
    %c0_i32 = arith.constant 0 : i32
    %c0_i32_0 = arith.constant 0 : i32
    %c0_i32_1 = arith.constant 0 : i32
    return %c0_i32, %c0_i32_0 : i32, i32
  }
  func.func @transform_7(%arg0: i32) -> (i32, i32) {
    %c0_i32 = arith.constant 0 : i32
    %c0_i32_0 = arith.constant 0 : i32
    return %arg0, %c0_i32 : i32, i32
  }
}

</mosaic_0001>

<llo_original>
// kernel: tpu_custom_call.1
$region0: #{tpu_custom_call.1}
  #allocation0 [shape = 'u32[]', space=smem, size = 0x4, offset = 0x4, fixed_abs, tag = 'smem constant byte address 0x4 - core index']
  #allocation1 [shape = 'u32[144,128]{1,0:T(1,128)}', space=vmem, size = 0x12000, scoped, tag = 'internal scratch']
  %s0 = inlined_call_operand.vmem [shape: f32[50,32], index: 0, kind: input, shape index: {}]
  %s1 = inlined_call_operand.vmem [shape: bf16[32,128], index: 1, kind: input, shape index: {}]
  %s2 = inlined_call_operand.vmem [shape: f32[1,128], index: 2, kind: input, shape index: {}]
  %s3 = inlined_call_operand.vmem [shape: bf16[128,128], index: 3, kind: input, shape index: {}]
  %s4 = inlined_call_operand.vmem [shape: f32[1,128], index: 4, kind: input, shape index: {}]
  %s5 = inlined_call_operand.vmem [shape: bf16[128,16], index: 5, kind: input, shape index: {}]
  %s6 = inlined_call_operand.vmem [shape: f32[1,16], index: 6, kind: input, shape index: {}]
  %s7 = inlined_call_operand.vmem [shape: f32[50,16], index: 7, kind: output, shape index: {}]
  %s8 = sld [smem:[#allocation0]]
  $region109: #{tpu_custom_call.1} parent=0
    _
  %s10 = ssub.s32 1, %s8
  %s11 = scalar_select 0, %s10, %s8
  $region1: #{tpu_custom_call.1} parent=0
    #allocation2 [shape = 'u8[16384]{0}', space=vmem, size = 0x4000, scoped, tag = 'output window, operand 0']
    loop: start=0, step=1, limit=6
    $region2: #{tpu_custom_call.1} parent=1 // loop_pre_header
      _
    $region3: #{tpu_custom_call.1} parent=1 // loop_header
      %s13 = sphi 0, %s17
      %p14 = scmp.ge.s32.totalorder %s13, 6
      %s23 = sphi 0, %s25
      %s26 = sphi 0, %s23
      %s27 = sphi 0, %s26
      %s43 = sphi 0, %s27
      %s47 = sphi 0, %s47
      %s49 = sphi 0, %s47
      %s50 = sphi 0, %s49
      %s64 = sphi 0, %s50
      %s68 = sphi 0, %s68
      %s70 = sphi 0, %s68
      %s71 = sphi 0, %s70
      %s85 = sphi 0, %s71
      %s89 = sphi 0, %s89
      %s91 = sphi 0, %s89
      %s92 = sphi 0, %s91
      %s106 = sphi 0, %s92
      %s110 = sphi 0, %s110
      %s112 = sphi 0, %s110
      %s113 = sphi 0, %s112
      %s127 = sphi 0, %s113
      %s131 = sphi 0, %s131
      %s133 = sphi 0, %s131
      %s134 = sphi 0, %s133
      %s148 = sphi 0, %s134
      %s152 = sphi 0, %s152
      %s154 = sphi 0, %s152
      %s155 = sphi 0, %s154
      %s169 = sphi 0, %s155
      %s175 = sphi 0, %s177
      %s178 = sphi 0, %s175
      %s179 = sphi 0, %s178
      %s195 = sphi 0, %s179
    $region4: #{tpu_custom_call.1} parent=1 // loop_header_branch
      %16 = sbr.rel (%p14) target = $region8
    $region5: #{tpu_custom_call.1} parent=1 // loop_body
      %s18 = ssub.s32 %s13, 1
      %s19 = ssub.s32 %s13, 2
      %s20 = sadd.s32 %s13, 1
      %s21 = ssub.s32 %s13, %s20
      %p22 = scmp.eq.s32.totalorder %s21, 0
      %s24 = sadd.s32 %s23, 1
      %s25 = scalar_select %p22, %s23, %s24
      %p28 = pneg %p22
      %p29 = scmp.eq.s32.totalorder %s13, 3
      %p30 = por %p28, %p29
      %p31 = scmp.ne.s32.totalorder %s23, %s26
      %p32 = scmp.eq.s32.totalorder %s13, 0
      %p33 = por %p31, %p32
      %p34 = scmp.ne.s32.totalorder %s23, %s26
      %p35 = scmp.eq.s32.totalorder %s18, 3
      %p36 = por %p34, %p35
      %p37 = scmp.ne.s32.totalorder %s26, %s27
      %p38 = scmp.eq.s32.totalorder %s18, 0
      %p39 = por %p37, %p38
      %p40 = scmp.ne.s32.totalorder %s26, %s27
      %p41 = scmp.eq.s32.totalorder %s19, 3
      %p42 = por %p40, %p41
      %p44 = scmp.ne.s32.totalorder %s27, %s43
      %p45 = scmp.eq.s32.totalorder %s19, 0
      %p46 = por %p44, %p45
      %s48 = sadd.s32 %s47, 1
      %p51 = scmp.eq.s32.totalorder %s13, 3
      %p52 = scmp.ne.s32.totalorder %s47, %s49
      %p53 = scmp.eq.s32.totalorder %s13, 0
      %p54 = por %p52, %p53
      %p55 = scmp.ne.s32.totalorder %s47, %s49
      %p56 = scmp.eq.s32.totalorder %s18, 3
      %p57 = por %p55, %p56
      %p58 = scmp.ne.s32.totalorder %s49, %s50
      %p59 = scmp.eq.s32.totalorder %s18, 0
      %p60 = por %p58, %p59
      %p61 = scmp.ne.s32.totalorder %s49, %s50
      %p62 = scmp.eq.s32.totalorder %s19, 3
      %p63 = por %p61, %p62
      %p65 = scmp.ne.s32.totalorder %s50, %s64
      %p66 = scmp.eq.s32.totalorder %s19, 0
      %p67 = por %p65, %p66
      %s69 = sadd.s32 %s68, 1
      %p72 = scmp.eq.s32.totalorder %s13, 3
      %p73 = scmp.ne.s32.totalorder %s68, %s70
      %p74 = scmp.eq.s32.totalorder %s13, 0
      %p75 = por %p73, %p74
      %p76 = scmp.ne.s32.totalorder %s68, %s70
      %p77 = scmp.eq.s32.totalorder %s18, 3
      %p78 = por %p76, %p77
      %p79 = scmp.ne.s32.totalorder %s70, %s71
      %p80 = scmp.eq.s32.totalorder %s18, 0
      %p81 = por %p79, %p80
      %p82 = scmp.ne.s32.totalorder %s70, %s71
      %p83 = scmp.eq.s32.totalorder %s19, 3
      %p84 = por %p82, %p83
      %p86 = scmp.ne.s32.totalorder %s71, %s85
      %p87 = scmp.eq.s32.totalorder %s19, 0
      %p88 = por %p86, %p87
      %s90 = sadd.s32 %s89, 1
      %p93 = scmp.eq.s32.totalorder %s13, 3
      %p94 = scmp.ne.s32.totalorder %s89, %s91
      %p95 = scmp.eq.s32.totalorder %s13, 0
      %p96 = por %p94, %p95
      %p97 = scmp.ne.s32.totalorder %s89, %s91
      %p98 = scmp.eq.s32.totalorder %s18, 3
      %p99 = por %p97, %p98
      %p100 = scmp.ne.s32.totalorder %s91, %s92
      %p101 = scmp.eq.s32.totalorder %s18, 0
      %p102 = por %p100, %p101
      %p103 = scmp.ne.s32.totalorder %s91, %s92
      %p104 = scmp.eq.s32.totalorder %s19, 3
      %p105 = por %p103, %p104
      %p107 = scmp.ne.s32.totalorder %s92, %s106
      %p108 = scmp.eq.s32.totalorder %s19, 0
      %p109 = por %p107, %p108
      %s111 = sadd.s32 %s110, 1
      %p114 = scmp.eq.s32.totalorder %s13, 3
      %p115 = scmp.ne.s32.totalorder %s110, %s112
      %p116 = scmp.eq.s32.totalorder %s13, 0
      %p117 = por %p115, %p116
      %p118 = scmp.ne.s32.totalorder %s110, %s112
      %p119 = scmp.eq.s32.totalorder %s18, 3
      %p120 = por %p118, %p119
      %p121 = scmp.ne.s32.totalorder %s112, %s113
      %p122 = scmp.eq.s32.totalorder %s18, 0
      %p123 = por %p121, %p122
      %p124 = scmp.ne.s32.totalorder %s112, %s113
      %p125 = scmp.eq.s32.totalorder %s19, 3
      %p126 = por %p124, %p125
      %p128 = scmp.ne.s32.totalorder %s113, %s127
      %p129 = scmp.eq.s32.totalorder %s19, 0
      %p130 = por %p128, %p129
      %s132 = sadd.s32 %s131, 1
      %p135 = scmp.eq.s32.totalorder %s13, 3
      %p136 = scmp.ne.s32.totalorder %s131, %s133
      %p137 = scmp.eq.s32.totalorder %s13, 0
      %p138 = por %p136, %p137
      %p139 = scmp.ne.s32.totalorder %s131, %s133
      %p140 = scmp.eq.s32.totalorder %s18, 3
      %p141 = por %p139, %p140
      %p142 = scmp.ne.s32.totalorder %s133, %s134
      %p143 = scmp.eq.s32.totalorder %s18, 0
      %p144 = por %p142, %p143
      %p145 = scmp.ne.s32.totalorder %s133, %s134
      %p146 = scmp.eq.s32.totalorder %s19, 3
      %p147 = por %p145, %p146
      %p149 = scmp.ne.s32.totalorder %s134, %s148
      %p150 = scmp.eq.s32.totalorder %s19, 0
      %p151 = por %p149, %p150
      %s153 = sadd.s32 %s152, 1
      %p156 = scmp.eq.s32.totalorder %s13, 3
      %p157 = scmp.ne.s32.totalorder %s152, %s154
      %p158 = scmp.eq.s32.totalorder %s13, 0
      %p159 = por %p157, %p158
      %p160 = scmp.ne.s32.totalorder %s152, %s154
      %p161 = scmp.eq.s32.totalorder %s18, 3
      %p162 = por %p160, %p161
      %p163 = scmp.ne.s32.totalorder %s154, %s155
      %p164 = scmp.eq.s32.totalorder %s18, 0
      %p165 = por %p163, %p164
      %p166 = scmp.ne.s32.totalorder %s154, %s155
      %p167 = scmp.eq.s32.totalorder %s19, 3
      %p168 = por %p166, %p167
      %p170 = scmp.ne.s32.totalorder %s155, %s169
      %p171 = scmp.eq.s32.totalorder %s19, 0
      %p172 = por %p170, %p171
      %s173 = ssub.s32 %s13, %s20
      %p174 = scmp.eq.s32.totalorder %s173, 0
      %s176 = sadd.s32 %s175, 1
      %s177 = scalar_select %p174, %s175, %s176
      %p180 = pneg %p174
      %p181 = scmp.eq.s32.totalorder %s13, 3
      %p182 = por %p180, %p181
      %p183 = scmp.ne.s32.totalorder %s175, %s178
      %p184 = scmp.eq.s32.totalorder %s13, 0
      %p185 = por %p183, %p184
      %p186 = scmp.ne.s32.totalorder %s175, %s178
      %p187 = scmp.eq.s32.totalorder %s18, 3
      %p188 = por %p186, %p187
      %p189 = scmp.ne.s32.totalorder %s178, %s179
      %p190 = scmp.eq.s32.totalorder %s18, 0
      %p191 = por %p189, %p190
      %p192 = scmp.ne.s32.totalorder %s178, %s179
      %p193 = scmp.eq.s32.totalorder %s19, 3
      %p194 = por %p192, %p193
      %p196 = scmp.ne.s32.totalorder %s179, %s195
      %p197 = scmp.eq.s32.totalorder %s19, 0
      %p198 = por %p196, %p197
      %p199 = scmp.le.s32.totalorder 1, %s13
      %p200 = scmp.lt.s32.totalorder %s13, 5
      %p201 = pnand %p199, %p200
      %p202 = pneg %p201
      // Predicated region
      $region9: #{tpu_custom_call.1} parent=5 // pred_check
        _
      $region10: #{tpu_custom_call.1} parent=5 // pred_check_branch
        %204 = sbr.rel (%p201) target = $region12
      $region11: #{tpu_custom_call.1} parent=5 // pred_region
        %s205 = ssub.s32 %s13, 1
        // Predicated region
        $region13: #{tpu_custom_call.1} parent=11 // pred_check
          %p206 = pneg %p60
        $region14: #{tpu_custom_call.1} parent=11 // pred_check_branch
          %208 = sbr.rel (%p206) target = $region16
        $region15: #{tpu_custom_call.1} parent=11 // pred_region
          _
        $region16: #{tpu_custom_call.1} parent=11 // pred_fallthru
          _
        // Predicated region
        $region17: #{tpu_custom_call.1} parent=11 // pred_check
          %p209 = pneg %p81
        $region18: #{tpu_custom_call.1} parent=11 // pred_check_branch
          %211 = sbr.rel (%p209) target = $region20
        $region19: #{tpu_custom_call.1} parent=11 // pred_region
          _
        $region20: #{tpu_custom_call.1} parent=11 // pred_fallthru
          _
        // Predicated region
        $region21: #{tpu_custom_call.1} parent=11 // pred_check
          %p212 = pneg %p102
        $region22: #{tpu_custom_call.1} parent=11 // pred_check_branch
          %214 = sbr.rel (%p212) target = $region24
        $region23: #{tpu_custom_call.1} parent=11 // pred_region
          _
        $region24: #{tpu_custom_call.1} parent=11 // pred_fallthru
          _
        // Predicated region
        $region25: #{tpu_custom_call.1} parent=11 // pred_check
          %p215 = pneg %p123
        $region26: #{tpu_custom_call.1} parent=11 // pred_check_branch
          %217 = sbr.rel (%p215) target = $region28
        $region27: #{tpu_custom_call.1} parent=11 // pred_region
          _
        $region28: #{tpu_custom_call.1} parent=11 // pred_fallthru
          _
        // Predicated region
        $region29: #{tpu_custom_call.1} parent=11 // pred_check
          %p218 = pneg %p144
        $region30: #{tpu_custom_call.1} parent=11 // pred_check_branch
          %220 = sbr.rel (%p218) target = $region32
        $region31: #{tpu_custom_call.1} parent=11 // pred_region
          _
        $region32: #{tpu_custom_call.1} parent=11 // pred_fallthru
          _
        // Predicated region
        $region33: #{tpu_custom_call.1} parent=11 // pred_check
          %p221 = pneg %p165
        $region34: #{tpu_custom_call.1} parent=11 // pred_check_branch
          %223 = sbr.rel (%p221) target = $region36
        $region35: #{tpu_custom_call.1} parent=11 // pred_region
          _
        $region36: #{tpu_custom_call.1} parent=11 // pred_fallthru
          _
      $region12: #{tpu_custom_call.1} parent=5 // pred_fallthru
        _
      %p224 = scmp.lt.s32.totalorder %s13, 4
      // Predicated region
      $region37: #{tpu_custom_call.1} parent=5 // pred_check
        %p225 = pneg %p224
      $region38: #{tpu_custom_call.1} parent=5 // pred_check_branch
        %227 = sbr.rel (%p225) target = $region40
      $region39: #{tpu_custom_call.1} parent=5 // pred_region
        // Predicated region
        $region41: #{tpu_custom_call.1} parent=39 // pred_check
          %p228 = pneg %p33
        $region42: #{tpu_custom_call.1} parent=39 // pred_check_branch
          %230 = sbr.rel (%p228) target = $region44
        $region43: #{tpu_custom_call.1} parent=39 // pred_region
          %s231 = smul.u32 2, %s13
          %s232 = ssub.s32 7, %s231
          %p233 = scmp.lt.s32.totalorder %s232, 2
          %s234 = scalar_select %p233, %s232, 2
          %s235 = smul.u32 128, %s234
          %p236 = scmp.lt.s32.totalorder %s231, 6
          %s237 = scalar_select %p236, %s231, 6
          %s238 = smul.addr %s237, 8
          %s239 = scalar_lea.vmem %s0, %s238
          %s240 = smul.u32 2, %s13
          %s241 = ssub.s32 7, %s240
          %p242 = scmp.lt.s32.totalorder %s241, 2
          %s243 = scalar_select %p242, %s241, 2
          %s244 = smul.u32 128, %s243
        $region44: #{tpu_custom_call.1} parent=39 // pred_fallthru
          _
      $region40: #{tpu_custom_call.1} parent=5 // pred_fallthru
        _
      %p245 = scmp.le.s32.totalorder 1, %s13
      %p246 = scmp.lt.s32.totalorder %s13, 5
      %p247 = pnand %p245, %p246
      %p248 = pneg %p247
      // Predicated region
      $region45: #{tpu_custom_call.1} parent=5 // pred_check
        _
      $region46: #{tpu_custom_call.1} parent=5 // pred_check_branch
        %250 = sbr.rel (%p247) target = $region48
      $region47: #{tpu_custom_call.1} parent=5 // pred_region
        %s251 = ssub.s32 %s13, 1
        %s252 = smul.u32 2, %s18
        %s253 = ssub.s32 7, %s252
        %p254 = scmp.lt.s32.totalorder %s253, 2
        %s255 = scalar_select %p254, %s253, 2
        %s256 = smul.u32 128, %s255
        %p257 = scmp.lt.s32.totalorder %s252, 6
        %s258 = scalar_select %p257, %s252, 6
        %s259 = smul.addr %s258, 8
        %s260 = scalar_lea.vmem %s0, %s259
        %p261 = pneg %p39
        %p262 = pneg %p36
        %p263 = pneg %p60
        %p264 = pneg %p57
        %p265 = pneg %p81
        %p266 = pneg %p78
        %p267 = pneg %p102
        %p268 = pneg %p99
        %p269 = pneg %p123
        %p270 = pneg %p120
        %p271 = pneg %p144
        %p272 = pneg %p141
        %p273 = pneg %p165
        %p274 = pneg %p162
        %p275 = pneg %p191
        %p276 = pneg %p188
        %s277 = sand.u32 %s178, 1
        %s278 = sand.u32 %s178, 1
        %s279 = smul.addr %s278, 16
        %s280 = scalar_lea.vmem [#allocation2], %s279
        %s281 = smul.u32 2, %s18
        %s282 = ssub.s32 7, %s281
        %p283 = scmp.lt.s32.totalorder %s282, 2
        %s284 = scalar_select %p283, %s282, 2
        %s285 = smul.u32 128, %s284
        %p286 = scmp.lt.s32.totalorder %s281, 6
        %s287 = scalar_select %p286, %s281, 6
        %s288 = smul.addr %s287, 8
        %s289 = scalar_lea.vmem %s0, %s288
        %s290 = smul.u32 2, %s18
        %s291 = ssub.s32 7, %s290
        %p292 = scmp.lt.s32.totalorder %s291, 2
        %s293 = scalar_select %p292, %s291, 2
        %s294 = smul.u32 128, %s293
        %s295 = smul.u32 2, %s18
        %s296 = ssub.s32 7, %s295
        %p297 = scmp.lt.s32.totalorder %s296, 2
        %s298 = scalar_select %p297, %s296, 2
        %s299 = smul.u32 128, %s298
        %v301 = vld [vmem:[%s289] sm:$0xff]
        %v302 = vld [vmem:[%s289 + $0x8] sm:$0xff]
        %v303 = vpack.c.bf16 %v302, %v301
        %v304 = vld [vmem:[%s1] sm:$0xf]
        %v305 = vld [vmem:[%s1 + $0x4] sm:$0xf]
        %v306 = vld [vmem:[%s1 + $0x8] sm:$0xf]
        %v307 = vld [vmem:[%s1 + $0xc] sm:$0xf]
        %v308 = vld [vmem:[%s2] sm:$0x1]
        %v310 = vlaneseq
        %v311 = vshrl.u32 %v310, 7
        %v312 = vsub.s32 0, %v311
        %v313 = vrot.slane %v308, %v312
        %v319 = vunpack.c.l.b16 %v304
        %v320 = vunpack.c.l.b16 %v305
        %v321 = vunpack.c.l.b16 %v306
        %v322 = vunpack.c.l.b16 %v307
        %v323 = vpack.c.b16 %v320, %v319
        %v324 = vpack.c.b16 %v322, %v321
        %vm327 = vcmask 261120
        %v329 = vsel %vm327, %v303, 0
        %331 = vmatprep.subr.bf16.mxu0 0
        %332 = vmatpush1.bf16.msra.mxu0 0
        %333 = vmatprep.subr.bf16.mxu0 0
        %334 = vmatpush1.bf16.msra.mxu0 0
        %335 = vmatprep.subr.bf16.mxu0 0
        %336 = vmatpush1.bf16.msra.mxu0 0
        %337 = vmatprep.subr.bf16.mxu0 0
        %338 = vmatpush1.bf16.msra.mxu0 0
        %339 = vmatprep.subr.bf16.mxu0 0
        %340 = vmatpush1.bf16.msra.mxu0 0
        %341 = vmatprep.subr.bf16.mxu0 0
        %342 = vmatpush1.bf16.msra.mxu0 0
        %343 = vmatprep.subr.bf16.mxu0 0
        %344 = vmatpush1.bf16.msra.mxu0 %v324
        %345 = vmatprep.subr.bf16.mxu0 0
        %346 = vmatpush1.bf16.msra.mxu0 %v323
        %347 = vmatprep.subr.bf16.mxu0 0
        %348 = vmatpush2.bf16.msra.mxu0 0
        %349 = vmatprep.subr.bf16.mxu0 0
        %350 = vmatpush2.bf16.msra.mxu0 0
        %351 = vmatprep.subr.bf16.mxu0 0
        %352 = vmatpush2.bf16.msra.mxu0 0
        %353 = vmatprep.subr.bf16.mxu0 0
        %354 = vmatpush2.bf16.msra.mxu0 0
        %355 = vmatprep.subr.bf16.mxu0 0
        %356 = vmatpush2.bf16.msra.mxu0 0
        %357 = vmatprep.subr.bf16.mxu0 0
        %358 = vmatpush2.bf16.msra.mxu0 0
        %359 = vmatprep.subr.bf16.mxu0 0
        %360 = vmatpush2.bf16.msra.mxu0 0
        %361 = vmatprep.subr.bf16.mxu0 0
        %362 = vmatpush2.bf16.msra.mxu0 0
        %363 = vmatprep.mubr.bf16.mxu0 0
        %364 = vmatmul.mubr.bf16.gmra.mxu0 %v329
        %v365 = vpop.f32.mrf.mxu0
        %v366 = vadd.f32 %v313, %v365
        %v367 = vpop.f32.mrf.mxu0
        %v368 = vpop.f32.mrf.mxu0
        %v369 = vadd.f32 %v313, %v368
        %v370 = vpop.f32.mrf.mxu0
        %371 = vdwg.mxu0
        %v372 = vtanh.pop %v366
        %v373 = vtanh.pop %v369
        %v374 = vpack.c.bf16 %v373, %v372
        %v375 = vld [vmem:[%s3] sm:$0xf]
        %v376 = vld [vmem:[%s3 + $0x4] sm:$0xf]
        %v377 = vld [vmem:[%s3 + $0x8] sm:$0xf]
        %v378 = vld [vmem:[%s3 + $0xc] sm:$0xf]
        %v379 = vld [vmem:[%s3 + $0x10] sm:$0xf]
        %v380 = vld [vmem:[%s3 + $0x14] sm:$0xf]
        %v381 = vld [vmem:[%s3 + $0x18] sm:$0xf]
        %v382 = vld [vmem:[%s3 + $0x1c] sm:$0xf]
        %v383 = vld [vmem:[%s3 + $0x20] sm:$0xf]
        %v384 = vld [vmem:[%s3 + $0x24] sm:$0xf]
        %v385 = vld [vmem:[%s3 + $0x28] sm:$0xf]
        %v386 = vld [vmem:[%s3 + $0x2c] sm:$0xf]
        %v387 = vld [vmem:[%s3 + $0x30] sm:$0xf]
        %v388 = vld [vmem:[%s3 + $0x34] sm:$0xf]
        %v389 = vld [vmem:[%s3 + $0x38] sm:$0xf]
        %v390 = vld [vmem:[%s3 + $0x3c] sm:$0xf]
        %v391 = vld [vmem:[%s4] sm:$0x1]
        %v393 = vlaneseq
        %v394 = vshrl.u32 %v393, 7
        %v395 = vsub.s32 0, %v394
        %v396 = vrot.slane %v391, %v395
        %v414 = vunpack.c.l.b16 %v375
        %v415 = vunpack.c.l.b16 %v376
        %v416 = vunpack.c.l.b16 %v377
        %v417 = vunpack.c.l.b16 %v378
        %v418 = vunpack.c.l.b16 %v379
        %v419 = vunpack.c.l.b16 %v380
        %v420 = vunpack.c.l.b16 %v381
        %v421 = vunpack.c.l.b16 %v382
        %v422 = vunpack.c.l.b16 %v383
        %v423 = vunpack.c.l.b16 %v384
        %v424 = vunpack.c.l.b16 %v385
        %v425 = vunpack.c.l.b16 %v386
        %v426 = vunpack.c.l.b16 %v387
        %v427 = vunpack.c.l.b16 %v388
        %v428 = vunpack.c.l.b16 %v389
        %v429 = vunpack.c.l.b16 %v390
        %v430 = vpack.c.b16 %v415, %v414
        %v431 = vpack.c.b16 %v417, %v416
        %v432 = vpack.c.b16 %v419, %v418
        %v433 = vpack.c.b16 %v421, %v420
        %v434 = vpack.c.b16 %v423, %v422
        %v435 = vpack.c.b16 %v425, %v424
        %v436 = vpack.c.b16 %v427, %v426
        %v437 = vpack.c.b16 %v429, %v428
        %446 = vmatprep.subr.bf16.mxu0 0
        %447 = vmatpush1.bf16.msra.mxu0 %v437
        %448 = vmatprep.subr.bf16.mxu0 0
        %449 = vmatpush1.bf16.msra.mxu0 %v436
        %450 = vmatprep.subr.bf16.mxu0 0
        %451 = vmatpush1.bf16.msra.mxu0 %v435
        %452 = vmatprep.subr.bf16.mxu0 0
        %453 = vmatpush1.bf16.msra.mxu0 %v434
        %454 = vmatprep.subr.bf16.mxu0 0
        %455 = vmatpush1.bf16.msra.mxu0 %v433
        %456 = vmatprep.subr.bf16.mxu0 0
        %457 = vmatpush1.bf16.msra.mxu0 %v432
        %458 = vmatprep.subr.bf16.mxu0 0
        %459 = vmatpush1.bf16.msra.mxu0 %v431
        %460 = vmatprep.subr.bf16.mxu0 0
        %461 = vmatpush1.bf16.msra.mxu0 %v430
        %462 = vmatprep.subr.bf16.mxu0 0
        %463 = vmatpush2.bf16.msra.mxu0 0
        %464 = vmatprep.subr.bf16.mxu0 0
        %465 = vmatpush2.bf16.msra.mxu0 0
        %466 = vmatprep.subr.bf16.mxu0 0
        %467 = vmatpush2.bf16.msra.mxu0 0
        %468 = vmatprep.subr.bf16.mxu0 0
        %469 = vmatpush2.bf16.msra.mxu0 0
        %470 = vmatprep.subr.bf16.mxu0 0
        %471 = vmatpush2.bf16.msra.mxu0 0
        %472 = vmatprep.subr.bf16.mxu0 0
        %473 = vmatpush2.bf16.msra.mxu0 0
        %474 = vmatprep.subr.bf16.mxu0 0
        %475 = vmatpush2.bf16.msra.mxu0 0
        %476 = vmatprep.subr.bf16.mxu0 0
        %477 = vmatpush2.bf16.msra.mxu0 0
        %478 = vmatprep.mubr.bf16.mxu0 0
        %479 = vmatmul.mubr.bf16.gmra.mxu0 %v374
        %v480 = vpop.f32.mrf.mxu0
        %v481 = vadd.f32 %v396, %v480
        %v482 = vpop.f32.mrf.mxu0
        %v483 = vpop.f32.mrf.mxu0
        %v484 = vadd.f32 %v396, %v483
        %v485 = vpop.f32.mrf.mxu0
        %486 = vdwg.mxu0
        %v487 = vtanh.pop %v481
        %v488 = vtanh.pop %v484
        %v489 = vpack.c.bf16 %v488, %v487
        %v490 = vld [vmem:[%s5] sm:$0xf]
        %v491 = vld [vmem:[%s5 + $0x4] sm:$0xf]
        %v492 = vld [vmem:[%s5 + $0x8] sm:$0xf]
        %v493 = vld [vmem:[%s5 + $0xc] sm:$0xf]
        %v494 = vld [vmem:[%s5 + $0x10] sm:$0xf]
        %v495 = vld [vmem:[%s5 + $0x14] sm:$0xf]
        %v496 = vld [vmem:[%s5 + $0x18] sm:$0xf]
        %v497 = vld [vmem:[%s5 + $0x1c] sm:$0xf]
        %v498 = vld [vmem:[%s5 + $0x20] sm:$0xf]
        %v499 = vld [vmem:[%s5 + $0x24] sm:$0xf]
        %v500 = vld [vmem:[%s5 + $0x28] sm:$0xf]
        %v501 = vld [vmem:[%s5 + $0x2c] sm:$0xf]
        %v502 = vld [vmem:[%s5 + $0x30] sm:$0xf]
        %v503 = vld [vmem:[%s5 + $0x34] sm:$0xf]
        %v504 = vld [vmem:[%s5 + $0x38] sm:$0xf]
        %v505 = vld [vmem:[%s5 + $0x3c] sm:$0xf]
        %v506 = vld [vmem:[%s6] sm:$0x1]
        %v508 = vlaneseq
        %v509 = vshrl.u32 %v508, 7
        %v510 = vsub.s32 0, %v509
        %v511 = vrot.slane %v506, %v510
        %v529 = vunpack.c.l.b16 %v490
        %v530 = vunpack.c.l.b16 %v491
        %v531 = vunpack.c.l.b16 %v492
        %v532 = vunpack.c.l.b16 %v493
        %v533 = vunpack.c.l.b16 %v494
        %v534 = vunpack.c.l.b16 %v495
        %v535 = vunpack.c.l.b16 %v496
        %v536 = vunpack.c.l.b16 %v497
        %v537 = vunpack.c.l.b16 %v498
        %v538 = vunpack.c.l.b16 %v499
        %v539 = vunpack.c.l.b16 %v500
        %v540 = vunpack.c.l.b16 %v501
        %v541 = vunpack.c.l.b16 %v502
        %v542 = vunpack.c.l.b16 %v503
        %v543 = vunpack.c.l.b16 %v504
        %v544 = vunpack.c.l.b16 %v505
        %v545 = vpack.c.b16 %v530, %v529
        %v546 = vpack.c.b16 %v532, %v531
        %v547 = vpack.c.b16 %v534, %v533
        %v548 = vpack.c.b16 %v536, %v535
        %v549 = vpack.c.b16 %v538, %v537
        %v550 = vpack.c.b16 %v540, %v539
        %v551 = vpack.c.b16 %v542, %v541
        %v552 = vpack.c.b16 %v544, %v543
        %561 = vmatprep.subr.bf16.mxu0 0
        %562 = vmatpush1.bf16.msra.mxu0 %v552
        %563 = vmatprep.subr.bf16.mxu0 0
        %564 = vmatpush1.bf16.msra.mxu0 %v551
        %565 = vmatprep.subr.bf16.mxu0 0
        %566 = vmatpush1.bf16.msra.mxu0 %v550
        %567 = vmatprep.subr.bf16.mxu0 0
        %568 = vmatpush1.bf16.msra.mxu0 %v549
        %569 = vmatprep.subr.bf16.mxu0 0
        %570 = vmatpush1.bf16.msra.mxu0 %v548
        %571 = vmatprep.subr.bf16.mxu0 0
        %572 = vmatpush1.bf16.msra.mxu0 %v547
        %573 = vmatprep.subr.bf16.mxu0 0
        %574 = vmatpush1.bf16.msra.mxu0 %v546
        %575 = vmatprep.subr.bf16.mxu0 0
        %576 = vmatpush1.bf16.msra.mxu0 %v545
        %577 = vmatprep.subr.bf16.mxu0 0
        %578 = vmatpush2.bf16.msra.mxu0 0
        %579 = vmatprep.subr.bf16.mxu0 0
        %580 = vmatpush2.bf16.msra.mxu0 0
        %581 = vmatprep.subr.bf16.mxu0 0
        %582 = vmatpush2.bf16.msra.mxu0 0
        %583 = vmatprep.subr.bf16.mxu0 0
        %584 = vmatpush2.bf16.msra.mxu0 0
        %585 = vmatprep.subr.bf16.mxu0 0
        %586 = vmatpush2.bf16.msra.mxu0 0
        %587 = vmatprep.subr.bf16.mxu0 0
        %588 = vmatpush2.bf16.msra.mxu0 0
        %589 = vmatprep.subr.bf16.mxu0 0
        %590 = vmatpush2.bf16.msra.mxu0 0
        %591 = vmatprep.subr.bf16.mxu0 0
        %592 = vmatpush2.bf16.msra.mxu0 0
        %593 = vmatprep.mubr.bf16.mxu0 0
        %594 = vmatmul.mubr.bf16.gmra.mxu0 %v489
        %v595 = vpop.f32.mrf.mxu0
        %v596 = vadd.f32 %v511, %v595
        %v597 = vpop.f32.mrf.mxu0
        %v598 = vpop.f32.mrf.mxu0
        %v599 = vadd.f32 %v511, %v598
        %v600 = vpop.f32.mrf.mxu0
        %601 = vdwg.mxu0
        %vm602 = vcmask 130048
        %603 = vst.msk [vmem:[%s280] sm:$0xff] %vm602, %v596
        %604 = vst.msk [vmem:[%s280 + $0x8] sm:$0xff] %vm602, %v599
        %s605 = sand.u32 %s178, 1
        %s606 = sand.u32 %s178, 1
        %s607 = smul.addr %s606, 16
        %s608 = scalar_lea.vmem [#allocation2], %s607
        // Predicated region
        $region49: #{tpu_custom_call.1} parent=47 // pred_check
          %p609 = pneg %p188
        $region50: #{tpu_custom_call.1} parent=47 // pred_check_branch
          %611 = sbr.rel (%p609) target = $region52
        $region51: #{tpu_custom_call.1} parent=47 // pred_region
          %s612 = smul.u32 2, %s18
          %s613 = ssub.s32 7, %s612
          %p614 = scmp.lt.s32.totalorder %s613, 2
          %s615 = scalar_select %p614, %s613, 2
          %s616 = smul.u32 128, %s615
          %p617 = scmp.ne.s32.totalorder 0, %s616
          %s618 = smul.addr %s612, 8
          %s619 = scalar_lea.vmem %s7, %s618
          // Predicated region
          $region53: #{tpu_custom_call.1} parent=51 // pred_check
            %p620 = pneg %p617
          $region54: #{tpu_custom_call.1} parent=51 // pred_check_branch
            %622 = sbr.rel (%p620) target = $region56
          $region55: #{tpu_custom_call.1} parent=51 // pred_region
            // Predicated region
            $region57: #{tpu_custom_call.1} parent=55 // pred_check
              _
            $region58: #{tpu_custom_call.1} parent=55 // pred_check_branch
              %624 = sbr.rel (0) target = $region60
            $region59: #{tpu_custom_call.1} parent=55 // pred_region
              // Predicated region
              $region79: #{tpu_custom_call.1} parent=59 // pred_check
                _
              $region80: #{tpu_custom_call.1} parent=59 // pred_check_branch
                %676 = sbr.rel (0) target = $region82
              $region81: #{tpu_custom_call.1} parent=59 // pred_region
                %s677 = sshrl.u32 %s615, 1
                // While loop
                $region83: #{tpu_custom_call.1} parent=81 // loop_pre_header
                  _
                $region84: #{tpu_custom_call.1} parent=81 // loop_header
                  %s679 = sphi 0, %s681
                  %p680 = scmp.ge.s32.totalorder %s679, %s677
                  %s684 = sphi 0, %s693
                  %s685 = sphi %s608, %s696
                  %s686 = sphi %s619, %s697
                $region85: #{tpu_custom_call.1} parent=81 // loop_header_branch
                  %683 = sbr.rel (%p680) target = $region89
                $region86: #{tpu_custom_call.1} parent=81 // loop_body
                  %v687 = vld [vmem:[%s685] sm:$0xff]
                  %688 = vst [vmem:[%s686] sm:$0xff] %v687
                  %v689 = vld [vmem:[%s685 + $0x8] sm:$0xff]
                  %690 = vst [vmem:[%s686 + $0x8] sm:$0xff] %v689
                  %s691 = sadd.s32 1, %s684
                  %p692 = scmp.ge.s32.totalorder %s691, %s677
                  %s693 = scalar_select %p692, 0, %s691
                  %s694 = smul.u32 %s693, 16
                  %s695 = smul.u32 %s693, 16
                  %s696 = scalar_lea.vmem %s608, %s694 [#allocation2]
                  %s697 = scalar_lea.vmem %s619, %s695
                $region87: #{tpu_custom_call.1} parent=81 // loop_footer
                  %s681 = sadd.s32 %s679, 1
                $region88: #{tpu_custom_call.1} parent=81 // loop_footer_branch
                  %678 = sbr.rel target = $region84
                $region89: #{tpu_custom_call.1} parent=81 // loop_exit
                  _
                %s698 = sshrl.u32 %s615, 1
                %s699 = sand.u32 %s615, 1
                %s700 = smul.u32 %s698, 2
                %s701 = smul.u32 8, %s700
                %s702 = scalar_lea.vmem %s608, %s701 [#allocation2]
                %s703 = smul.u32 8, %s700
                %s704 = scalar_lea.vmem %s619, %s703
                // While loop
                $region90: #{tpu_custom_call.1} parent=81 // loop_pre_header
                  _
                $region91: #{tpu_custom_call.1} parent=81 // loop_header
                  %s706 = sphi 0, %s708
                  %p707 = scmp.ge.s32.totalorder %s706, %s699
                  %s711 = sphi 0, %s718
                  %s712 = sphi %s702, %s721
                  %s713 = sphi %s704, %s722
                $region92: #{tpu_custom_call.1} parent=81 // loop_header_branch
                  %710 = sbr.rel (%p707) target = $region96
                $region93: #{tpu_custom_call.1} parent=81 // loop_body
                  %v714 = vld [vmem:[%s712] sm:$0xff]
                  %715 = vst [vmem:[%s713] sm:$0xff] %v714
                  %s716 = sadd.s32 1, %s711
                  %p717 = scmp.ge.s32.totalorder %s716, %s699
                  %s718 = scalar_select %p717, 0, %s716
                  %s719 = smul.u32 %s718, 8
                  %s720 = smul.u32 %s718, 8
                  %s721 = scalar_lea.vmem %s702, %s719 [#allocation2]
                  %s722 = scalar_lea.vmem %s704, %s720
                $region94: #{tpu_custom_call.1} parent=81 // loop_footer
                  %s708 = sadd.s32 %s706, 1
                $region95: #{tpu_custom_call.1} parent=81 // loop_footer_branch
                  %705 = sbr.rel target = $region91
                $region96: #{tpu_custom_call.1} parent=81 // loop_exit
                  _
              $region82: #{tpu_custom_call.1} parent=59 // pred_fallthru
                _
              // Predicated region
              $region97: #{tpu_custom_call.1} parent=59 // pred_check
                _
              $region98: #{tpu_custom_call.1} parent=59 // pred_check_branch
                %724 = sbr.rel target = $region100
              $region99: #{tpu_custom_call.1} parent=59 // pred_region
                _
              $region100: #{tpu_custom_call.1} parent=59 // pred_fallthru
                _
            $region60: #{tpu_custom_call.1} parent=55 // pred_fallthru
              _
            // Predicated region
            $region61: #{tpu_custom_call.1} parent=55 // pred_check
              _
            $region62: #{tpu_custom_call.1} parent=55 // pred_check_branch
              %626 = sbr.rel target = $region64
            $region63: #{tpu_custom_call.1} parent=55 // pred_region
              %s628 = ssub.s32 256, 1
              %s629 = sshrl.u32 %s615, 1
              // While loop
              $region65: #{tpu_custom_call.1} parent=63 // loop_pre_header
                _
              $region66: #{tpu_custom_call.1} parent=63 // loop_header
                %s631 = sphi 0, %s633
                %p632 = scmp.ge.s32.totalorder %s631, %s629
                %s636 = sphi 0, %s645
                %s637 = sphi %s608, %s648
                %s638 = sphi %s619, %s649
              $region67: #{tpu_custom_call.1} parent=63 // loop_header_branch
                %635 = sbr.rel (%p632) target = $region71
              $region68: #{tpu_custom_call.1} parent=63 // loop_body
                %v639 = vld [vmem:[%s637] sm:%s628]
                %640 = vst [vmem:[%s638] sm:%s628] %v639
                %v641 = vld [vmem:[%s637 + $0x8] sm:%s628]
                %642 = vst [vmem:[%s638 + $0x8] sm:%s628] %v641
                %s643 = sadd.s32 1, %s636
                %p644 = scmp.ge.s32.totalorder %s643, %s629
                %s645 = scalar_select %p644, 0, %s643
                %s646 = smul.u32 %s645, 16
                %s647 = smul.u32 %s645, 16
                %s648 = scalar_lea.vmem %s608, %s646 [#allocation2]
                %s649 = scalar_lea.vmem %s619, %s647
              $region69: #{tpu_custom_call.1} parent=63 // loop_footer
                %s633 = sadd.s32 %s631, 1
              $region70: #{tpu_custom_call.1} parent=63 // loop_footer_branch
                %630 = sbr.rel target = $region66
              $region71: #{tpu_custom_call.1} parent=63 // loop_exit
                _
              %s650 = sshrl.u32 %s615, 1
              %s651 = sand.u32 %s615, 1
              %s652 = smul.u32 %s650, 2
              %s653 = smul.u32 8, %s652
              %s654 = scalar_lea.vmem %s608, %s653 [#allocation2]
              %s655 = smul.u32 8, %s652
              %s656 = scalar_lea.vmem %s619, %s655
              // While loop
              $region72: #{tpu_custom_call.1} parent=63 // loop_pre_header
                _
              $region73: #{tpu_custom_call.1} parent=63 // loop_header
                %s658 = sphi 0, %s660
                %p659 = scmp.ge.s32.totalorder %s658, %s651
                %s663 = sphi 0, %s670
                %s664 = sphi %s654, %s673
                %s665 = sphi %s656, %s674
              $region74: #{tpu_custom_call.1} parent=63 // loop_header_branch
                %662 = sbr.rel (%p659) target = $region78
              $region75: #{tpu_custom_call.1} parent=63 // loop_body
                %v666 = vld [vmem:[%s664] sm:%s628]
                %667 = vst [vmem:[%s665] sm:%s628] %v666
                %s668 = sadd.s32 1, %s663
                %p669 = scmp.ge.s32.totalorder %s668, %s651
                %s670 = scalar_select %p669, 0, %s668
                %s671 = smul.u32 %s670, 8
                %s672 = smul.u32 %s670, 8
                %s673 = scalar_lea.vmem %s654, %s671 [#allocation2]
                %s674 = scalar_lea.vmem %s656, %s672
              $region76: #{tpu_custom_call.1} parent=63 // loop_footer
                %s660 = sadd.s32 %s658, 1
              $region77: #{tpu_custom_call.1} parent=63 // loop_footer_branch
                %657 = sbr.rel target = $region73
              $region78: #{tpu_custom_call.1} parent=63 // loop_exit
                _
            $region64: #{tpu_custom_call.1} parent=55 // pred_fallthru
              _
          $region56: #{tpu_custom_call.1} parent=51 // pred_fallthru
            _
          %725 = vnop
        $region52: #{tpu_custom_call.1} parent=47 // pred_fallthru
          _
      $region48: #{tpu_custom_call.1} parent=5 // pred_fallthru
        _
      %p726 = scmp.le.s32.totalorder 2, %s13
      // Predicated region
      $region101: #{tpu_custom_call.1} parent=5 // pred_check
        %p727 = pneg %p726
      $region102: #{tpu_custom_call.1} parent=5 // pred_check_branch
        %729 = sbr.rel (%p727) target = $region104
      $region103: #{tpu_custom_call.1} parent=5 // pred_region
        %s730 = ssub.s32 %s13, 2
        // Predicated region
        $region105: #{tpu_custom_call.1} parent=103 // pred_check
          %p731 = pneg %p194
        $region106: #{tpu_custom_call.1} parent=103 // pred_check_branch
          %733 = sbr.rel (%p731) target = $region108
        $region107: #{tpu_custom_call.1} parent=103 // pred_region
          %s734 = sand.u32 %s179, 1
          %s735 = sand.u32 %s179, 1
          %s736 = smul.addr %s735, 16
          %s737 = scalar_lea.vmem [#allocation2], %s736
        $region108: #{tpu_custom_call.1} parent=103 // pred_fallthru
          _
      $region104: #{tpu_custom_call.1} parent=5 // pred_fallthru
        _
    $region6: #{tpu_custom_call.1} parent=1 // loop_footer
      %s17 = sadd.s32 1, %s13
    $region7: #{tpu_custom_call.1} parent=1 // loop_footer_branch
      %12 = sbr.rel target = $region3
    $region8: #{tpu_custom_call.1} parent=1 // loop_exit
      _

</llo_original>
